<compile_context>
chip_gen: v5e
topology: v5e:2x2
jax: 0.10.0
libtpu: 0.0.40
codegen_flags: <defaults>
</compile_context>

<pallas_src>
import jax
import jax.numpy as jnp
from jax.experimental import pallas as pl
from jax.experimental.pallas import tpu as pltpu


def _mlp_kernel(xu_ref, xp_ref, w1u_ref, w1p_ref, b1_ref, w2_ref, b2_ref,
                w3r_ref, b3_ref, o_ref):
    cdt = w1u_ref.dtype  # compute (MXU) dtype, e.g. bf16

    # In-kernel f32 -> bf16 cast of the activation tiles (VPU slot, hidden under
    # the activation DMA); avoids a separate wrapper-side cast pass over HBM.
    xu = xu_ref[...].astype(cdt)
    xp = xp_ref[...].astype(cdt)

    # fc1 on the two un-concatenated halves (w1 split at trace time): MXU, f32 acc.
    h1 = jnp.dot(xu, w1u_ref[...], preferred_element_type=jnp.float32)
    h1 = h1 + jnp.dot(xp, w1p_ref[...], preferred_element_type=jnp.float32)
    h1 = jnp.maximum(h1 + b1_ref[...], 0.0)                      # relu(fc1), f32

    # fc2: cast back to the compute dtype for the MXU, accumulate in f32.
    h2 = jnp.dot(h1.astype(cdt), w2_ref[...], preferred_element_type=jnp.float32)
    h2 = jnp.maximum(h2 + b2_ref[...], 0.0)                      # relu(fc2), f32

    # fc3 (out_features == 1), lane-dense: (1, out_sz) contracted with h2's last
    # dim -> (1, TB).  Batch ends up on the lane axis, so the store below is a
    # full-lane, unmasked write and the output DMA is contiguous.
    out_row = jax.lax.dot_general(
        w3r_ref[...], h2.astype(cdt),
        dimension_numbers=(((1,), (1,)), ((), ())),
        preferred_element_type=jnp.float32)                      # (1, TB)
    o_ref[...] = (out_row + b3_ref[...]).astype(o_ref.dtype)


def recommendation_forward(user_input, product_input, params, *,
                           block_batch=4096, compute_dtype=jnp.bfloat16,
                           vmem_limit_bytes=32 * 1024 * 1024):
    """Forward of RecommendationModel.

    user_input:    [B, user_feat]    float32
    product_input: [B, product_feat] float32
    returns:       [B, 1] float32

    block_batch is the primary tuning knob.  4096 is safe on v5e/v6e/v7x with the
    default 32 MiB VMEM limit; on v5e/v6e raise block_batch to 8192-16384 together
    with vmem_limit_bytes≈64 MiB.  On v7x keep pl.cdiv(B, tb) >= 2 for large B so
    both TensorCores are fed.
    """
    w1, b1, w2, b2, w3, b3 = params
    B, uf = user_input.shape
    Bp, pf = product_input.shape
    assert B == Bp
    input_size = uf + pf
    assert w1.shape[0] == input_size
    hidden = w1.shape[1]
    out_sz = w2.shape[1]

    # Batch tile: full batch when it fits, otherwise a multiple of 8 sublanes.
    if B <= block_batch:
        tb = B
    else:
        tb = max(8, (block_batch // 8) * 8)
    num_tiles = pl.cdiv(B, tb)

    # Trace-time weight prep (weights are tiny; the activations stay f32 and are
    # cast inside the kernel).
    w1u = w1[:uf].astype(compute_dtype)
    w1p = w1[uf:].astype(compute_dtype)
    w2c = w2.astype(compute_dtype)
    w3r = w3.reshape(1, out_sz).astype(compute_dtype)      # [out_sz,1] -> [1,out_sz]
    b1f = b1.reshape(1, hidden).astype(jnp.float32)
    b2f = b2.reshape(1, out_sz).astype(jnp.float32)
    b3f = b3.reshape(1, 1).astype(jnp.float32)

    rows = lambda i: (i, 0)     # batch-tiled activation stream (double-buffered)
    whole = lambda i: (0, 0)    # VMEM-resident weights/biases (same block each step)

    itemsize_c = jnp.dtype(compute_dtype).itemsize
    flops = 2 * B * (input_size * hidden + hidden * out_sz + out_sz)
    bytes_accessed = (
        (user_input.size + product_input.size) * 4                         # f32 acts
        + (w1u.size + w1p.size + w2c.size + w3r.size) * itemsize_c         # weights
        + (b1f.size + b2f.size + b3f.size) * 4                             # biases
        + B * 4)                                                           # output

    out_padded = pl.pallas_call(
        _mlp_kernel,
        out_shape=jax.ShapeDtypeStruct((num_tiles, 1, tb), jnp.float32),
        grid=(num_tiles,),
        in_specs=[
            pl.BlockSpec((tb, uf), rows),            # user rows (f32)
            pl.BlockSpec((tb, pf), rows),            # product rows (f32)
            pl.BlockSpec((uf, hidden), whole),       # w1[:uf]
            pl.BlockSpec((pf, hidden), whole),       # w1[uf:]
            pl.BlockSpec((1, hidden), whole),        # b1
            pl.BlockSpec((hidden, out_sz), whole),   # w2
            pl.BlockSpec((1, out_sz), whole),        # b2
            pl.BlockSpec((1, out_sz), whole),        # w3 row
            pl.BlockSpec((1, 1), whole),             # b3
        ],
        # Lane-dense output: one (1, tb) row per grid step.
        out_specs=pl.BlockSpec((None, 1, tb), lambda i: (i, 0, 0)),
        compiler_params=pltpu.CompilerParams(
            dimension_semantics=("parallel",),       # shard batch across v7x's 2 TCs
            vmem_limit_bytes=vmem_limit_bytes,
        ),
        cost_estimate=pl.CostEstimate(
            flops=flops, transcendentals=0, bytes_accessed=bytes_accessed),
    )(user_input.astype(jnp.float32), product_input.astype(jnp.float32),
      w1u, w1p, b1f, w2c, b2f, w3r, b3f)

    # (num_tiles, 1, tb) -> (B, 1). Reshape is contiguous; the [:B] slice only
    # copies (tiny) when B is not a multiple of the batch tile.
    return out_padded.reshape(num_tiles * tb)[:B].reshape(B, 1)


def init_params(key, input_size, hidden_size, output_size):
    """Deterministic init mimicking torch nn.Linear (uniform +-1/sqrt(fan_in))."""
    def linear(k, fan_in, fan_out):
        kw, kb = jax.random.split(k)
        bound = 1.0 / jnp.sqrt(fan_in)
        w = jax.random.uniform(kw, (fan_in, fan_out), jnp.float32, -bound, bound)
        b = jax.random.uniform(kb, (1, fan_out), jnp.float32, -bound, bound)
        return w, b

    k1, k2, k3 = jax.random.split(key, 3)
    w1, b1 = linear(k1, input_size, hidden_size)
    w2, b2 = linear(k2, hidden_size, output_size)
    w3, b3 = linear(k3, output_size, 1)
    return (w1, b1, w2, b2, w3, b3)


def reference_forward(user_input, product_input, params, compute_dtype=jnp.bfloat16):
    """Pure-JAX reference mirroring the kernel's math (bf16 MXU operands, f32 acc,
    split-K fc1, f32 bias/ReLU epilogues)."""
    w1, b1, w2, b2, w3, b3 = params
    _, uf = user_input.shape
    xu = user_input.astype(compute_dtype)
    xp = product_input.astype(compute_dtype)
    h1 = (jnp.dot(xu, w1[:uf].astype(compute_dtype), preferred_element_type=jnp.float32)
          + jnp.dot(xp, w1[uf:].astype(compute_dtype), preferred_element_type=jnp.float32))
    h1 = jnp.maximum(h1 + b1.reshape(1, -1), 0.0)
    h2 = jnp.dot(h1.astype(compute_dtype), w2.astype(compute_dtype),
                 preferred_element_type=jnp.float32)
    h2 = jnp.maximum(h2 + b2.reshape(1, -1), 0.0)
    out = jnp.dot(h2.astype(compute_dtype), w3.astype(compute_dtype),
                  preferred_element_type=jnp.float32)
    return out + b3.reshape(1, 1)


# TODO(synk): RecommendationModel.get_recommendations is an empty stub (`pass`) in
# the PyTorch module; there is nothing to translate for it.

if __name__ == "__main__":
    # Small shapes consistent with the module: user 16 + product 16 -> input_size 32.
    user_feat, product_feat = 16, 16
    input_size = user_feat + product_feat
    hidden_size = 32
    output_size = 16

    key = jax.random.PRNGKey(0)
    k_u, k_p, k_params = jax.random.split(key, 3)
    params = init_params(k_params, input_size, hidden_size, output_size)

    # Case 1: single-tile path (B <= block_batch).
    batch = 8
    user_input = jax.random.normal(k_u, (batch, user_feat), jnp.float32)
    product_input = jax.random.normal(k_p, (batch, product_feat), jnp.float32)
    out = jax.block_until_ready(
        recommendation_forward(user_input, product_input, params))
    ref = reference_forward(user_input, product_input, params)
    assert out.shape == (batch, 1)
    assert jnp.allclose(out, ref, atol=2e-3, rtol=2e-3), (
        f"max abs err {jnp.max(jnp.abs(out - ref))}")

    # Case 2: multi-tile path with a partial final tile (exercises grid > 1 and the
    # padded lane-dense output writeback).
    batch2 = 20
    k_u2, k_p2 = jax.random.split(jax.random.PRNGKey(1))
    user_input2 = jax.random.normal(k_u2, (batch2, user_feat), jnp.float32)
    product_input2 = jax.random.normal(k_p2, (batch2, product_feat), jnp.float32)
    out2 = jax.block_until_ready(
        recommendation_forward(user_input2, product_input2, params, block_batch=8))
    ref2 = reference_forward(user_input2, product_input2, params)
    assert out2.shape == (batch2, 1)
    assert jnp.allclose(out2, ref2, atol=2e-3, rtol=2e-3), (
        f"max abs err {jnp.max(jnp.abs(out2 - ref2))}")

    print("KERNEL_OK")
</pallas_src>

<mosaic_0001>
module attributes {stable_mosaic.version = 11 : i64} {
  func.func @_mlp_kernel(%arg0: i32, %arg1: memref<8x16xf32, #tpu.memory_space<vmem>>, %arg2: memref<8x16xf32, #tpu.memory_space<vmem>>, %arg3: memref<16x32xbf16, #tpu.memory_space<vmem>>, %arg4: memref<16x32xbf16, #tpu.memory_space<vmem>>, %arg5: memref<1x32xf32, #tpu.memory_space<vmem>>, %arg6: memref<32x16xbf16, #tpu.memory_space<vmem>>, %arg7: memref<1x16xf32, #tpu.memory_space<vmem>>, %arg8: memref<1x16xbf16, #tpu.memory_space<vmem>>, %arg9: memref<1x1xf32, #tpu.memory_space<vmem>>, %arg10: memref<1x1x8xf32, #tpu.memory_space<vmem>>) attributes {dimension_semantics = [#tpu.dimension_semantics<parallel>], iteration_bounds = array<i64: 1>, scalar_prefetch = 0 : i64, scratch_operands = 0 : i64, tpu.core_type = #tpu.core_type<tc>, window_params = [{transform_indices = @transform_0, window_bounds = array<i64: 8, 16>}, {transform_indices = @transform_1, window_bounds = array<i64: 8, 16>}, {pipeline_mode = #tpu.pipeline_mode<synchronous>, transform_indices = @transform_2, window_bounds = array<i64: 16, 32>}, {pipeline_mode = #tpu.pipeline_mode<synchronous>, transform_indices = @transform_3, window_bounds = array<i64: 16, 32>}, {pipeline_mode = #tpu.pipeline_mode<synchronous>, transform_indices = @transform_4, window_bounds = array<i64: 1, 32>}, {pipeline_mode = #tpu.pipeline_mode<synchronous>, transform_indices = @transform_5, window_bounds = array<i64: 32, 16>}, {pipeline_mode = #tpu.pipeline_mode<synchronous>, transform_indices = @transform_6, window_bounds = array<i64: 1, 16>}, {pipeline_mode = #tpu.pipeline_mode<synchronous>, transform_indices = @transform_7, window_bounds = array<i64: 1, 16>}, {pipeline_mode = #tpu.pipeline_mode<synchronous>, transform_indices = @transform_8, window_bounds = array<i64: 1, 1>}, {transform_indices = @transform_9, window_bounds = array<i64: 1, 1, 8>}]} {
    %c0 = arith.constant 0 : index
    %c0_0 = arith.constant 0 : index
    %0 = vector.load %arg1[%c0, %c0_0] : memref<8x16xf32, #tpu.memory_space<vmem>>, vector<8x16xf32>
    %1 = arith.truncf %0 : vector<8x16xf32> to vector<8x16xbf16>
    %c0_1 = arith.constant 0 : index
    %c0_2 = arith.constant 0 : index
    %2 = vector.load %arg2[%c0_1, %c0_2] : memref<8x16xf32, #tpu.memory_space<vmem>>, vector<8x16xf32>
    %3 = arith.truncf %2 : vector<8x16xf32> to vector<8x16xbf16>
    %c0_3 = arith.constant 0 : index
    %c0_4 = arith.constant 0 : index
    %4 = vector.load %arg3[%c0_3, %c0_4] : memref<16x32xbf16, #tpu.memory_space<vmem>>, vector<16x32xbf16>
    %cst = arith.constant dense<0.000000e+00> : vector<8x32xf32>
    %5 = tpu.matmul %1, %4, %cst {dimension_numbers = #tpu.dot_dimension_numbers<[1], [0], [0], [1], [0, 0, 1, 1], [], []>} : vector<8x16xbf16>, vector<16x32xbf16>, vector<8x32xf32> -> vector<8x32xf32>
    %c0_5 = arith.constant 0 : index
    %c0_6 = arith.constant 0 : index
    %6 = vector.load %arg4[%c0_5, %c0_6] : memref<16x32xbf16, #tpu.memory_space<vmem>>, vector<16x32xbf16>
    %cst_7 = arith.constant dense<0.000000e+00> : vector<8x32xf32>
    %7 = tpu.matmul %3, %6, %cst_7 {dimension_numbers = #tpu.dot_dimension_numbers<[1], [0], [0], [1], [0, 0, 1, 1], [], []>} : vector<8x16xbf16>, vector<16x32xbf16>, vector<8x32xf32> -> vector<8x32xf32>
    %8 = arith.addf %5, %7 : vector<8x32xf32>
    %c0_8 = arith.constant 0 : index
    %c0_9 = arith.constant 0 : index
    %9 = vector.load %arg5[%c0_8, %c0_9] : memref<1x32xf32, #tpu.memory_space<vmem>>, vector<1x32xf32>
    %10 = vector.broadcast %9 : vector<1x32xf32> to vector<8x32xf32>
    %11 = arith.addf %8, %10 : vector<8x32xf32>
    %cst_10 = arith.constant 0.000000e+00 : f32
    %12 = vector.broadcast %cst_10 : f32 to vector<8x32xf32>
    %13 = arith.maximumf %11, %12 : vector<8x32xf32>
    %14 = arith.truncf %13 : vector<8x32xf32> to vector<8x32xbf16>
    %c0_11 = arith.constant 0 : index
    %c0_12 = arith.constant 0 : index
    %15 = vector.load %arg6[%c0_11, %c0_12] : memref<32x16xbf16, #tpu.memory_space<vmem>>, vector<32x16xbf16>
    %cst_13 = arith.constant dense<0.000000e+00> : vector<8x16xf32>
    %16 = tpu.matmul %14, %15, %cst_13 {dimension_numbers = #tpu.dot_dimension_numbers<[1], [0], [0], [1], [0, 0, 1, 1], [], []>} : vector<8x32xbf16>, vector<32x16xbf16>, vector<8x16xf32> -> vector<8x16xf32>
    %c0_14 = arith.constant 0 : index
    %c0_15 = arith.constant 0 : index
    %17 = vector.load %arg7[%c0_14, %c0_15] : memref<1x16xf32, #tpu.memory_space<vmem>>, vector<1x16xf32>
    %18 = vector.broadcast %17 : vector<1x16xf32> to vector<8x16xf32>
    %19 = arith.addf %16, %18 : vector<8x16xf32>
    %cst_16 = arith.constant 0.000000e+00 : f32
    %20 = vector.broadcast %cst_16 : f32 to vector<8x16xf32>
    %21 = arith.maximumf %19, %20 : vector<8x16xf32>
    %c0_17 = arith.constant 0 : index
    %c0_18 = arith.constant 0 : index
    %22 = vector.load %arg8[%c0_17, %c0_18] : memref<1x16xbf16, #tpu.memory_space<vmem>>, vector<1x16xbf16>
    %23 = arith.truncf %21 : vector<8x16xf32> to vector<8x16xbf16>
    %cst_19 = arith.constant dense<0.000000e+00> : vector<1x8xf32>
    %24 = tpu.matmul %22, %23, %cst_19 {dimension_numbers = #tpu.dot_dimension_numbers<[1], [1], [0], [0], [0, 0, 1, 0], [], []>} : vector<1x16xbf16>, vector<8x16xbf16>, vector<1x8xf32> -> vector<1x8xf32>
    %c0_20 = arith.constant 0 : index
    %c0_21 = arith.constant 0 : index
    %25 = vector.load %arg9[%c0_20, %c0_21] : memref<1x1xf32, #tpu.memory_space<vmem>>, vector<1x1xf32>
    %26 = vector.broadcast %25 : vector<1x1xf32> to vector<1x8xf32>
    %27 = arith.addf %24, %26 : vector<1x8xf32>
    %c0_22 = arith.constant 0 : index
    %c0_23 = arith.constant 0 : index
    %c0_24 = arith.constant 0 : index
    %28 = vector.load %arg10[%c0_22, %c0_23, %c0_24] : memref<1x1x8xf32, #tpu.memory_space<vmem>>, vector<1x1x8xf32>
    %29 = vector.shape_cast %28 : vector<1x1x8xf32> to vector<1x8xf32>
    %30 = vector.shape_cast %27 : vector<1x8xf32> to vector<1x1x8xf32>
    tpu.vector_store %arg10[%c0_22, %c0_23, %c0_24], %30 {strides = array<i32>} : memref<1x1x8xf32, #tpu.memory_space<vmem>>, vector<1x1x8xf32>,
    return
  }
  func.func @transform_0(%arg0: i32) -> (i32, i32) {
    %c0_i32 = arith.constant 0 : i32
    %c0_i32_0 = arith.constant 0 : i32
    return %arg0, %c0_i32 : i32, i32
  }
  func.func @transform_1(%arg0: i32) -> (i32, i32) {
    %c0_i32 = arith.constant 0 : i32
    %c0_i32_0 = arith.constant 0 : i32
    return %arg0, %c0_i32 : i32, i32
  }
  func.func @transform_2(%arg0: i32) -> (i32, i32) {
    %c0_i32 = arith.constant 0 : i32
    %c0_i32_0 = arith.constant 0 : i32
    %c0_i32_1 = arith.constant 0 : i32
    return %c0_i32, %c0_i32_0 : i32, i32
  }
  func.func @transform_3(%arg0: i32) -> (i32, i32) {
    %c0_i32 = arith.constant 0 : i32
    %c0_i32_0 = arith.constant 0 : i32
    %c0_i32_1 = arith.constant 0 : i32
    return %c0_i32, %c0_i32_0 : i32, i32
  }
  func.func @transform_4(%arg0: i32) -> (i32, i32) {
    %c0_i32 = arith.constant 0 : i32
    %c0_i32_0 = arith.constant 0 : i32
    %c0_i32_1 = arith.constant 0 : i32
    return %c0_i32, %c0_i32_0 : i32, i32
  }
  func.func @transform_5(%arg0: i32) -> (i32, i32) {
    %c0_i32 = arith.constant 0 : i32
    %c0_i32_0 = arith.constant 0 : i32
    %c0_i32_1 = arith.constant 0 : i32
    return %c0_i32, %c0_i32_0 : i32, i32
  }
  func.func @transform_6(%arg0: i32) -> (i32, i32) {
    %c0_i32 = arith.constant 0 : i32
    %c0_i32_0 = arith.constant 0 : i32
    %c0_i32_1 = arith.constant 0 : i32
    return %c0_i32, %c0_i32_0 : i32, i32
  }
  func.func @transform_7(%arg0: i32) -> (i32, i32) {
    %c0_i32 = arith.constant 0 : i32
    %c0_i32_0 = arith.constant 0 : i32
    %c0_i32_1 = arith.constant 0 : i32
    return %c0_i32, %c0_i32_0 : i32, i32
  }
  func.func @transform_8(%arg0: i32) -> (i32, i32) {
    %c0_i32 = arith.constant 0 : i32
    %c0_i32_0 = arith.constant 0 : i32
    %c0_i32_1 = arith.constant 0 : i32
    return %c0_i32, %c0_i32_0 : i32, i32
  }
  func.func @transform_9(%arg0: i32) -> (i32, i32, i32) {
    %c0_i32 = arith.constant 0 : i32
    %c0_i32_0 = arith.constant 0 : i32
    %c0_i32_1 = arith.constant 0 : i32
    return %arg0, %c0_i32, %c0_i32_0 : i32, i32, i32
  }
}

</mosaic_0001>

<llo_original>
// kernel: tpu_custom_call.1
$region0: #{tpu_custom_call.1}
  #allocation0 [shape = 'u32[]', space=smem, size = 0x4, offset = 0x4, fixed_abs, tag = 'smem constant byte address 0x4 - core index']
  #allocation1 [shape = 'u32[72,128]{1,0:T(1,128)}', space=vmem, size = 0x9000, scoped, tag = 'internal scratch']
  #allocation2 [shape = 'f32[1,1]{1,0:T(1,128)S(1)}', space=vmem, size = 0x200, scoped, tag = 'scoped memory for tpu_custom_call.1']
  %s0 = inlined_call_operand.vmem [shape: f32[8,16], index: 0, kind: input, shape index: {}]
  %s1 = inlined_call_operand.vmem [shape: f32[8,16], index: 1, kind: input, shape index: {}]
  %s2 = inlined_call_operand.vmem [shape: bf16[16,32], index: 2, kind: input, shape index: {}]
  %s3 = inlined_call_operand.hbm [shape: bf16[16,32], index: 3, kind: input, shape index: {}]
  %s4 = inlined_call_operand.vmem [shape: f32[1,32], index: 4, kind: input, shape index: {}]
  %s5 = inlined_call_operand.vmem [shape: bf16[32,16], index: 5, kind: input, shape index: {}]
  %s6 = inlined_call_operand.vmem [shape: f32[1,16], index: 6, kind: input, shape index: {}]
  %s7 = inlined_call_operand.vmem [shape: bf16[1,16], index: 7, kind: input, shape index: {}]
  %s8 = inlined_call_operand.<no memory space> [shape: f32[1,1], index: 8, kind: input, shape index: {}]
  %s9 = inlined_call_operand.hbm [shape: f32[1,1,8], index: 9, kind: output, shape index: {}]
  %s10 = sld [smem:[#allocation0]]
  $region50: #{tpu_custom_call.1} parent=0
    _
  %s12 = ssub.s32 1, %s10
  %s13 = scalar_select 0, %s12, %s10
  %v14 = vstv %s8
  %15 = vst [vmem:[#allocation2] sm:$0x1] %v14
  $region1: #{tpu_custom_call.1} parent=0
    #allocation3 [shape = 'u8[4096]{0}', space=vmem, size = 0x1000, scoped, tag = 'input window, operand 3, single buffered']
    #allocation4 [shape = 's32[1]{0}', space=sflag, size = 0x4, scoped, tag = 'scoped memory for tpu_custom_call.1']
    #allocation5 [shape = 's32[1]{0}', space=sflag, size = 0x4, scoped, tag = 'scoped memory for tpu_custom_call.1']
    #allocation6 [shape = 'u8[512]{0}', space=vmem, size = 0x400, scoped, tag = 'output window, operand 0, single buffered']
    %16 = vsyncpa [#allocation4], 0
    %17 = vsyncpa [#allocation5], 0
    // Predicated region
    $region2: #{tpu_custom_call.1} parent=1 // pred_check
      _
    $region3: #{tpu_custom_call.1} parent=1 // pred_check_branch
      %19 = sbr.rel (0) target = $region5
    $region4: #{tpu_custom_call.1} parent=1 // pred_region
      _
    $region5: #{tpu_custom_call.1} parent=1 // pred_fallthru
      _
    // Predicated region
    $region6: #{tpu_custom_call.1} parent=1 // pred_check
      _
    $region7: #{tpu_custom_call.1} parent=1 // pred_check_branch
      %21 = sbr.rel (0) target = $region9
    $region8: #{tpu_custom_call.1} parent=1 // pred_region
      _
    $region9: #{tpu_custom_call.1} parent=1 // pred_fallthru
      _
    // Predicated region
    $region10: #{tpu_custom_call.1} parent=1 // pred_check
      _
    $region11: #{tpu_custom_call.1} parent=1 // pred_check_branch
      %23 = sbr.rel (0) target = $region13
    $region12: #{tpu_custom_call.1} parent=1 // pred_region
      _
    $region13: #{tpu_custom_call.1} parent=1 // pred_fallthru
      _
    // Predicated region
    $region14: #{tpu_custom_call.1} parent=1 // pred_check
      _
    $region15: #{tpu_custom_call.1} parent=1 // pred_check_branch
      %25 = sbr.rel (0) target = $region17
    $region16: #{tpu_custom_call.1} parent=1 // pred_region
      %27 = vsyncadd [#allocation4], 0
      %s28 = sshll.u32 %s3, 4
      %s29 = int_to_ptr.hbm [resolvable:$true] %s28
      %s30 = sshll.u32 [#allocation3], 4
      %s31 = int_to_ptr.vmem [resolvable:$true] %s30
      %36 = dma.hbm_to_vmem [thread:$0]  %s29, 128, %s31, [#allocation4], 64, 64, 4
    $region17: #{tpu_custom_call.1} parent=1 // pred_fallthru
      _
    // Predicated region
    $region18: #{tpu_custom_call.1} parent=1 // pred_check
      _
    $region19: #{tpu_custom_call.1} parent=1 // pred_check_branch
      %38 = sbr.rel (0) target = $region21
    $region20: #{tpu_custom_call.1} parent=1 // pred_region
      _
    $region21: #{tpu_custom_call.1} parent=1 // pred_fallthru
      _
    // Predicated region
    $region22: #{tpu_custom_call.1} parent=1 // pred_check
      _
    $region23: #{tpu_custom_call.1} parent=1 // pred_check_branch
      %40 = sbr.rel (0) target = $region25
    $region24: #{tpu_custom_call.1} parent=1 // pred_region
      _
    $region25: #{tpu_custom_call.1} parent=1 // pred_fallthru
      _
    // Predicated region
    $region26: #{tpu_custom_call.1} parent=1 // pred_check
      _
    $region27: #{tpu_custom_call.1} parent=1 // pred_check_branch
      %42 = sbr.rel (0) target = $region29
    $region28: #{tpu_custom_call.1} parent=1 // pred_region
      _
    $region29: #{tpu_custom_call.1} parent=1 // pred_fallthru
      _
    // Predicated region
    $region30: #{tpu_custom_call.1} parent=1 // pred_check
      _
    $region31: #{tpu_custom_call.1} parent=1 // pred_check_branch
      %44 = sbr.rel (0) target = $region33
    $region32: #{tpu_custom_call.1} parent=1 // pred_region
      _
    $region33: #{tpu_custom_call.1} parent=1 // pred_fallthru
      _
    // Predicated region
    $region34: #{tpu_custom_call.1} parent=1 // pred_check
      _
    $region35: #{tpu_custom_call.1} parent=1 // pred_check_branch
      %46 = sbr.rel (0) target = $region37
    $region36: #{tpu_custom_call.1} parent=1 // pred_region
      _
    $region37: #{tpu_custom_call.1} parent=1 // pred_fallthru
      _
    // Predicated region
    $region38: #{tpu_custom_call.1} parent=1 // pred_check
      _
    $region39: #{tpu_custom_call.1} parent=1 // pred_check_branch
      %48 = sbr.rel (0) target = $region41
    $region40: #{tpu_custom_call.1} parent=1 // pred_region
      %50 = dma.done [#allocation4], 128
    $region41: #{tpu_custom_call.1} parent=1 // pred_fallthru
      _
    %v52 = vld [vmem:[%s0] sm:$0xff]
    %v53 = vpack.c.bf16 %v52, %v52
    %v54 = vld [vmem:[%s1] sm:$0xff]
    %v55 = vpack.c.bf16 %v54, %v54
    %v56 = vld [vmem:[%s2] sm:$0xf]
    %v57 = vld [vmem:[%s2 + $0x4] sm:$0xf]
    %v58 = vld [vmem:[#allocation3] sm:$0xf]
    %v59 = vld [vmem:[#allocation3 + $0x4] sm:$0xf]
    %v62 = vunpack.c.l.b16 %v58
    %v63 = vunpack.c.l.b16 %v59
    %v64 = vpack.c.b16 %v63, %v62
    %vm66 = vcmask 130048
    %v68 = vsel %vm66, %v55, 0
    %70 = vmatpush.bf16.msra.mxu0 0
    %71 = vmatpush.bf16.msra.mxu0 0
    %72 = vmatpush.bf16.msra.mxu0 0
    %73 = vmatpush.bf16.msra.mxu0 0
    %74 = vmatpush.bf16.msra.mxu0 0
    %75 = vmatpush.bf16.msra.mxu0 0
    %76 = vmatpush.bf16.msra.mxu0 0
    %77 = vmatpush.bf16.msra.mxu0 %v64
    %78 = vmatmul.bf16.gmra.mxu0 %v68
    %v79 = vpop.f32.mrf.mxu0
    %v80 = vadd.f32 0.0, %v79
    %v81 = vpop.f32.mrf.mxu0
    %82 = vdwg.mxu0
    %v85 = vunpack.c.l.b16 %v56
    %v86 = vunpack.c.l.b16 %v57
    %v87 = vpack.c.b16 %v86, %v85
    %v90 = vsel %vm66, %v53, 0
    %92 = vmatpush.bf16.msra.mxu0 0
    %93 = vmatpush.bf16.msra.mxu0 0
    %94 = vmatpush.bf16.msra.mxu0 0
    %95 = vmatpush.bf16.msra.mxu0 0
    %96 = vmatpush.bf16.msra.mxu0 0
    %97 = vmatpush.bf16.msra.mxu0 0
    %98 = vmatpush.bf16.msra.mxu0 0
    %99 = vmatpush.bf16.msra.mxu0 %v87
    %100 = vmatmul.bf16.gmra.mxu0 %v90
    %v101 = vpop.f32.mrf.mxu0
    %v102 = vadd.f32 %v80, %v101
    %v103 = vpop.f32.mrf.mxu0
    %104 = vdwg.mxu0
    %v105 = vld [vmem:[%s4] sm:$0x1]
    %v107 = vperm.slane %v105, 0
    %v109 = vadd.f32 %v102, %v107
    %v110 = vmax.f32 %v109, 0.0
    %v111 = vpack.c.bf16 %v110, %v110
    %v112 = vld [vmem:[%s5] sm:$0xf]
    %v113 = vld [vmem:[%s5 + $0x4] sm:$0xf]
    %v114 = vld [vmem:[%s5 + $0x8] sm:$0xf]
    %v115 = vld [vmem:[%s5 + $0xc] sm:$0xf]
    %v116 = vld [vmem:[%s6] sm:$0x1]
    %v118 = vperm.slane %v116, 0
    %v124 = vunpack.c.l.b16 %v112
    %v125 = vunpack.c.l.b16 %v113
    %v126 = vunpack.c.l.b16 %v114
    %v127 = vunpack.c.l.b16 %v115
    %v128 = vpack.c.b16 %v125, %v124
    %v129 = vpack.c.b16 %v127, %v126
    %vm132 = vcmask 261120
    %v134 = vsel %vm132, %v111, 0
    %136 = vmatpush.bf16.msra.mxu0 0
    %137 = vmatpush.bf16.msra.mxu0 0
    %138 = vmatpush.bf16.msra.mxu0 0
    %139 = vmatpush.bf16.msra.mxu0 0
    %140 = vmatpush.bf16.msra.mxu0 0
    %141 = vmatpush.bf16.msra.mxu0 0
    %142 = vmatpush.bf16.msra.mxu0 %v129
    %143 = vmatpush.bf16.msra.mxu0 %v128
    %144 = vmatmul.bf16.gmra.mxu0 %v134
    %v145 = vpop.f32.mrf.mxu0
    %v146 = vadd.f32 %v118, %v145
    %v147 = vpop.f32.mrf.mxu0
    %148 = vdwg.mxu0
    %v149 = vmax.f32 %v146, 0.0
    %v150 = vld [vmem:[%s7] sm:$0x1]
    %v151 = vpack.c.bf16 %v149, %v149
    %v152 = vld [vmem:[#allocation2] sm:$0x1]
    %154 = vset.pattern.permute.xlu0 0
    %155 = vperm.xlu0 %154, %v152
    %v156 = vpop.permute.xlu0 %155
    %v158 = vperm.slane %v156, 0
    %v160 = vsel %vm66, %v150, 0
    %v163 = vsel %vm66, %v151, 0
    %165 = vmatpush.bf16.xpose.msra.mxu0 0
    %166 = vmatpush.bf16.xpose.msra.mxu0 0
    %167 = vmatpush.bf16.xpose.msra.mxu0 0
    %168 = vmatpush.bf16.xpose.msra.mxu0 0
    %169 = vmatpush.bf16.xpose.msra.mxu0 0
    %170 = vmatpush.bf16.xpose.msra.mxu0 0
    %171 = vmatpush.bf16.xpose.msra.mxu0 0
    %172 = vmatpush.bf16.xpose.msra.mxu0 %v163
    %173 = vmatmul.bf16.gmra.mxu0 %v160
    %v174 = vpop.f32.mrf.mxu0
    %v175 = vadd.f32 %v158, %v174
    %v176 = vpop.f32.mrf.mxu0
    %177 = vdwg.mxu0
    %vm178 = vcmask 57344
    %179 = vst.msk [vmem:[#allocation6] sm:$0x1] %vm178, %v175
    // Predicated region
    $region42: #{tpu_custom_call.1} parent=1 // pred_check
      _
    $region43: #{tpu_custom_call.1} parent=1 // pred_check_branch
      %181 = sbr.rel (0) target = $region45
    $region44: #{tpu_custom_call.1} parent=1 // pred_region
      %183 = vsyncadd [#allocation5], 0
      %s185 = sshll.u32 [#allocation6], 4
      %s186 = int_to_ptr.vmem [resolvable:$true] %s185
      %s187 = sshll.u32 %s9, 4
      %s188 = int_to_ptr.hbm [resolvable:$true] %s187
      %190 = dma.vmem_to_hbm [thread:$0]  %s186, 16, %s188, [#allocation5]
    $region45: #{tpu_custom_call.1} parent=1 // pred_fallthru
      _
    // Predicated region
    $region46: #{tpu_custom_call.1} parent=1 // pred_check
      _
    $region47: #{tpu_custom_call.1} parent=1 // pred_check_branch
      %192 = sbr.rel (0) target = $region49
    $region48: #{tpu_custom_call.1} parent=1 // pred_region
      %194 = dma.done [#allocation5], 16
    $region49: #{tpu_custom_call.1} parent=1 // pred_fallthru
      _
    %195 = vsyncpa [#allocation4], 1
    %196 = vsyncpa [#allocation5], 1

</llo_original>
